<compile_context>
chip_gen: v6e
topology: v6e:2x2x1
jax: 0.10.0
libtpu: 0.0.40
codegen_flags: <defaults>
</compile_context>

<pallas_src>
import functools

import jax
import jax.numpy as jnp
from jax.experimental import pallas as pl
from jax.experimental.pallas import tpu as pltpu


def _round_up(x, m):
    return ((x + m - 1) // m) * m


def _cdiv(a, b):
    return -(-a // b)


def _tpu_info():
    """(vmem_capacity_bytes, num_tensorcores) with conservative fallbacks."""
    vmem_cap = 64 * 2**20          # smallest across v5e/v6e (128 MiB) / v7x (64 MiB)
    cores = 1                      # v5e / v6e: 1 TensorCore per chip
    try:
        info = pltpu.get_tpu_info()
        cap = getattr(info, "vmem_capacity_bytes", None)
        if cap:
            vmem_cap = int(cap)
        for attr in ("num_cores", "core_count", "num_tensorcores",
                     "tensorcores_per_chip"):
            v = getattr(info, attr, None)
            if isinstance(v, int) and v > 0:
                cores = v
                break
    except Exception:              # not queryable here: keep safe fallbacks
        pass
    return vmem_cap, cores


def _choose_tile_h(h, d, w_bytes, vmem_capacity_bytes):
    """Keep both weight panels resident (tile_h == H) unless their
    double-buffered footprint exceeds ~25% of this generation's VMEM."""
    budget = vmem_capacity_bytes // 4
    resident = 2 * 2 * d * h * w_bytes          # 2 weight panels, double-buffered
    if resident <= budget or h <= 128:
        return h
    tile = (budget // (2 * 2 * d * w_bytes)) // 128 * 128
    return int(max(128, min(tile, h)))


def _choose_tile_n(n, d, in_bytes, tile_h, out_bytes, num_cores,
                   target_step_bytes=4 * 2**20):
    """Row tile sized from bytes/step (~4 MiB of feature+output traffic),
    clamped to [512, 4096] and to the problem size; split across TensorCores
    only on multi-TC parts."""
    per_row = max(1, 2 * d * in_bytes + tile_h * out_bytes)
    tile = (target_step_bytes // per_row) // 8 * 8
    tile = max(512, min(tile, 4096))
    n8 = _round_up(max(n, 1), 8)
    tile = min(tile, n8)
    if num_cores > 1:
        n_tiles = _cdiv(n8, tile)
        if n_tiles < num_cores and n8 > 8 * num_cores:
            tile = _round_up(_cdiv(n8, num_cores), 8)
    return max(tile, 8)


def _sage_update_kernel(x_ref, nb_ref, w_self_ref, w_nbr_ref, b_ref, o_ref,
                        *, compute_dtype):
    # x_ref, nb_ref: [tile_n, D] (native dtype)    w_*_ref: [D, tile_h]
    # b_ref: [1, tile_h] (f32)                     o_ref: [tile_n, tile_h]
    x = x_ref[...]
    nb = nb_ref[...]
    if compute_dtype is not None:
        # Cast on the VPU right before the MXU dots: avoids a separate XLA
        # convert pass (extra HBM read+write) over the feature matrices.
        x = x.astype(compute_dtype)
        nb = nb.astype(compute_dtype)
    # TODO(synk): if D >= 128 configs become MXU-bound, have the producer emit
    # a single [N, 2D] layout so one K=2D dot replaces the two K=D dots.
    acc = jnp.dot(x, w_self_ref[...], preferred_element_type=jnp.float32)
    acc = acc + jnp.dot(nb, w_nbr_ref[...], preferred_element_type=jnp.float32)
    acc = acc + b_ref[...]                           # f32 bias broadcast over rows
    o_ref[...] = jnp.maximum(acc, 0.0).astype(o_ref.dtype)


def graphsage_update(node_feats, nbr_feats, w_self, w_nbr, bias, *,
                     compute_dtype=jnp.bfloat16, out_dtype=None):
    """relu(cat([x, nbr], -1) @ W + b) with W pre-split into W_self/W_nbr
    ([D, H], in x out).  Features are read in their native dtype and cast to
    `compute_dtype` inside the kernel (pass compute_dtype=None for exact-dtype
    dots); `out_dtype=jnp.bfloat16` halves output traffic if the consumer
    tolerates it."""
    N, D = node_feats.shape
    H = w_self.shape[1]
    assert nbr_feats.shape == (N, D)
    assert w_self.shape == (D, H) and w_nbr.shape == (D, H) and bias.shape == (H,)
    out_dtype = node_feats.dtype if out_dtype is None else out_dtype

    vmem_cap, num_cores = _tpu_info()

    # Only the tiny weight/bias tensors are converted wrapper-side.
    if compute_dtype is not None:
        w_self = w_self.astype(compute_dtype)
        w_nbr = w_nbr.astype(compute_dtype)
    b2 = bias.astype(jnp.float32).reshape(1, H)

    in_bytes = node_feats.dtype.itemsize
    w_bytes = w_self.dtype.itemsize
    out_bytes = jnp.dtype(out_dtype).itemsize

    tile_h = _choose_tile_h(H, D, w_bytes, vmem_cap)
    tile_n = _choose_tile_n(N, D, in_bytes, tile_h, out_bytes, num_cores)

    # Double-buffered VMEM footprint for a given row tile.
    def _vmem_est(tn):
        return (2 * 2 * tn * D * in_bytes        # x, nbr tiles
                + 2 * 2 * D * tile_h * w_bytes   # W_self, W_nbr panels
                + 2 * tile_h * 4                 # bias
                + 2 * tn * tile_h * out_bytes)   # output tile

    # Safety: keep the footprint within ~3/8 of physical VMEM so the raised
    # limit (2x estimate) stays under the 75% cap even on v7x's 64 MiB.
    while tile_n > 8 and _vmem_est(tile_n) > (3 * vmem_cap) // 8:
        tile_n = _round_up(tile_n // 2, 8)

    n_rows = _cdiv(N, tile_n)
    n_h = _cdiv(H, tile_h)

    # Grid-axis order chosen by re-read traffic: H innermost -> weights are
    # re-fetched once per row tile; rows innermost -> features re-fetched once
    # per H panel.  (With tile_h == H it's a single H block either way.)
    feat_total = 2 * N * D * in_bytes
    w_total = 2 * D * H * w_bytes
    rows_outer = (n_h == 1) or (n_rows * w_total + feat_total
                                <= n_h * feat_total + w_total)
    if rows_outer:
        grid = (n_rows, n_h)
        row_of = lambda a, b: a
        col_of = lambda a, b: b
        bytes_accessed = (feat_total + n_rows * w_total
                          + n_rows * H * 4 + N * H * out_bytes)
    else:
        grid = (n_h, n_rows)
        row_of = lambda a, b: b
        col_of = lambda a, b: a
        bytes_accessed = (n_h * feat_total + w_total
                          + H * 4 + N * H * out_bytes)

    cost = pl.CostEstimate(flops=int(2 * N * (2 * D) * H),
                           transcendentals=0,
                           bytes_accessed=int(bytes_accessed))

    # Raise the scoped VMEM limit only when v5e's 16 MiB default would not
    # fit; cap at 75% of physical VMEM to leave compiler-scratch headroom.
    # NOTE: when tile_h == H the weight/bias block indices are constant, so
    # pipeline_mode=pl.Buffered(1) could single-buffer them; skipped since the
    # residency budget above already accounts for double-buffering.
    vmem_est = _vmem_est(tile_n)
    compiler_kwargs = dict(dimension_semantics=("parallel", "parallel"))
    if vmem_est > 12 * 2**20:
        compiler_kwargs["vmem_limit_bytes"] = int(
            min(max(2 * vmem_est, 16 * 2**20), (3 * vmem_cap) // 4))

    kernel = functools.partial(_sage_update_kernel, compute_dtype=compute_dtype)

    return pl.pallas_call(
        kernel,
        out_shape=jax.ShapeDtypeStruct((N, H), out_dtype),   # no pad, no post-slice
        grid_spec=pltpu.PrefetchScalarGridSpec(
            num_scalar_prefetch=0,
            grid=grid,
            in_specs=[
                pl.BlockSpec((tile_n, D), lambda a, b: (row_of(a, b), 0)),   # node feats
                pl.BlockSpec((tile_n, D), lambda a, b: (row_of(a, b), 0)),   # nbr feats
                pl.BlockSpec((D, tile_h), lambda a, b: (0, col_of(a, b))),   # W_self
                pl.BlockSpec((D, tile_h), lambda a, b: (0, col_of(a, b))),   # W_nbr
                pl.BlockSpec((1, tile_h), lambda a, b: (0, col_of(a, b))),   # bias
            ],
            out_specs=pl.BlockSpec((tile_n, tile_h),
                                   lambda a, b: (row_of(a, b), col_of(a, b))),
        ),
        compiler_params=pltpu.CompilerParams(**compiler_kwargs),
        cost_estimate=cost,
    )(node_feats, nbr_feats, w_self, w_nbr, b2)


def reference(node_feats, nbr_feats, w_self, w_nbr, bias):
    combined = jnp.concatenate([node_feats, nbr_feats], axis=-1)
    w_full = jnp.concatenate([w_self, w_nbr], axis=0)        # [2D, H]
    return jnp.maximum(combined @ w_full + bias, 0.0)


if __name__ == "__main__":
    N, D, H = 128, 64, 128          # num_nodes, input_dim, hidden_dim

    key = jax.random.PRNGKey(0)
    k_x, k_n, k_w, k_b = jax.random.split(key, 4)

    node_feats = jax.random.normal(k_x, (N, D), dtype=jnp.float32)
    nbr_feats = jax.random.normal(k_n, (N, D), dtype=jnp.float32)

    # nn.Linear(2*D, H) init: U(-1/sqrt(fan_in), 1/sqrt(fan_in)), fan_in = 2*D.
    bound = 1.0 / (2 * D) ** 0.5
    w_full = jax.random.uniform(k_w, (2 * D, H), dtype=jnp.float32,
                                minval=-bound, maxval=bound)   # [in, out]
    bias = jax.random.uniform(k_b, (H,), dtype=jnp.float32,
                              minval=-bound, maxval=bound)
    w_self, w_nbr = w_full[:D], w_full[D:]

    out = graphsage_update(node_feats, nbr_feats, w_self, w_nbr, bias)
    out = jax.block_until_ready(out)

    # Reference computed from the same bf16-rounded operands the kernel uses
    # on the MXU (the kernel accumulates in f32, so the tolerance stays tight).
    bf = jnp.bfloat16
    ref = reference(node_feats.astype(bf).astype(jnp.float32),
                    nbr_feats.astype(bf).astype(jnp.float32),
                    w_self.astype(bf).astype(jnp.float32),
                    w_nbr.astype(bf).astype(jnp.float32),
                    bias)

    assert out.shape == (N, H)
    assert out.dtype == node_feats.dtype
    assert jnp.allclose(out, ref.astype(out.dtype), atol=2e-3, rtol=2e-3), \
        "mismatch vs reference"

    print("KERNEL_OK")
</pallas_src>

<mosaic_0001>
module attributes {stable_mosaic.version = 11 : i64} {
  func.func @_sage_update_kernel(%arg0: i32, %arg1: i32, %arg2: memref<128x64xf32, #tpu.memory_space<vmem>>, %arg3: memref<128x64xf32, #tpu.memory_space<vmem>>, %arg4: memref<64x128xbf16, #tpu.memory_space<vmem>>, %arg5: memref<64x128xbf16, #tpu.memory_space<vmem>>, %arg6: memref<1x128xf32, #tpu.memory_space<vmem>>, %arg7: memref<128x128xf32, #tpu.memory_space<vmem>>) attributes {dimension_semantics = [#tpu.dimension_semantics<parallel>, #tpu.dimension_semantics<parallel>], iteration_bounds = array<i64: 1, 1>, scalar_prefetch = 0 : i64, scratch_operands = 0 : i64, tpu.core_type = #tpu.core_type<tc>, window_params = [{transform_indices = @transform_0, window_bounds = array<i64: 128, 64>}, {transform_indices = @transform_1, window_bounds = array<i64: 128, 64>}, {transform_indices = @transform_2, window_bounds = array<i64: 64, 128>}, {transform_indices = @transform_3, window_bounds = array<i64: 64, 128>}, {transform_indices = @transform_4, window_bounds = array<i64: 1, 128>}, {transform_indices = @transform_5, window_bounds = array<i64: 128, 128>}]} {
    %c0 = arith.constant 0 : index
    %c0_0 = arith.constant 0 : index
    %0 = vector.load %arg2[%c0, %c0_0] : memref<128x64xf32, #tpu.memory_space<vmem>>, vector<128x64xf32>
    %c0_1 = arith.constant 0 : index
    %c0_2 = arith.constant 0 : index
    %1 = vector.load %arg3[%c0_1, %c0_2] : memref<128x64xf32, #tpu.memory_space<vmem>>, vector<128x64xf32>
    %2 = arith.truncf %0 : vector<128x64xf32> to vector<128x64xbf16>
    %3 = arith.truncf %1 : vector<128x64xf32> to vector<128x64xbf16>
    %c0_3 = arith.constant 0 : index
    %c0_4 = arith.constant 0 : index
    %4 = vector.load %arg4[%c0_3, %c0_4] : memref<64x128xbf16, #tpu.memory_space<vmem>>, vector<64x128xbf16>
    %cst = arith.constant dense<0.000000e+00> : vector<128x128xf32>
    %5 = tpu.matmul %2, %4, %cst {dimension_numbers = #tpu.dot_dimension_numbers<[1], [0], [0], [1], [0, 0, 1, 1], [], []>} : vector<128x64xbf16>, vector<64x128xbf16>, vector<128x128xf32> -> vector<128x128xf32>
    %c0_5 = arith.constant 0 : index
    %c0_6 = arith.constant 0 : index
    %6 = vector.load %arg5[%c0_5, %c0_6] : memref<64x128xbf16, #tpu.memory_space<vmem>>, vector<64x128xbf16>
    %cst_7 = arith.constant dense<0.000000e+00> : vector<128x128xf32>
    %7 = tpu.matmul %3, %6, %cst_7 {dimension_numbers = #tpu.dot_dimension_numbers<[1], [0], [0], [1], [0, 0, 1, 1], [], []>} : vector<128x64xbf16>, vector<64x128xbf16>, vector<128x128xf32> -> vector<128x128xf32>
    %8 = arith.addf %5, %7 : vector<128x128xf32>
    %c0_8 = arith.constant 0 : index
    %c0_9 = arith.constant 0 : index
    %9 = vector.load %arg6[%c0_8, %c0_9] : memref<1x128xf32, #tpu.memory_space<vmem>>, vector<1x128xf32>
    %10 = vector.broadcast %9 : vector<1x128xf32> to vector<128x128xf32>
    %11 = arith.addf %8, %10 : vector<128x128xf32>
    %cst_10 = arith.constant 0.000000e+00 : f32
    %12 = vector.broadcast %cst_10 : f32 to vector<128x128xf32>
    %13 = arith.maximumf %11, %12 : vector<128x128xf32>
    %c0_11 = arith.constant 0 : index
    %c0_12 = arith.constant 0 : index
    %14 = vector.load %arg7[%c0_11, %c0_12] : memref<128x128xf32, #tpu.memory_space<vmem>>, vector<128x128xf32>
    tpu.vector_store %arg7[%c0_11, %c0_12], %13 {strides = array<i32>} : memref<128x128xf32, #tpu.memory_space<vmem>>, vector<128x128xf32>,
    return
  }
  func.func @transform_0(%arg0: i32, %arg1: i32) -> (i32, i32) {
    %c0_i32 = arith.constant 0 : i32
    %c0_i32_0 = arith.constant 0 : i32
    return %arg0, %c0_i32 : i32, i32
  }
  func.func @transform_1(%arg0: i32, %arg1: i32) -> (i32, i32) {
    %c0_i32 = arith.constant 0 : i32
    %c0_i32_0 = arith.constant 0 : i32
    return %arg0, %c0_i32 : i32, i32
  }
  func.func @transform_2(%arg0: i32, %arg1: i32) -> (i32, i32) {
    %c0_i32 = arith.constant 0 : i32
    %c0_i32_0 = arith.constant 0 : i32
    return %c0_i32, %arg1 : i32, i32
  }
  func.func @transform_3(%arg0: i32, %arg1: i32) -> (i32, i32) {
    %c0_i32 = arith.constant 0 : i32
    %c0_i32_0 = arith.constant 0 : i32
    return %c0_i32, %arg1 : i32, i32
  }
  func.func @transform_4(%arg0: i32, %arg1: i32) -> (i32, i32) {
    %c0_i32 = arith.constant 0 : i32
    %c0_i32_0 = arith.constant 0 : i32
    return %c0_i32, %arg1 : i32, i32
  }
  func.func @transform_5(%arg0: i32, %arg1: i32) -> (i32, i32) {
    %c0_i32 = arith.constant 0 : i32
    return %arg0, %arg1 : i32, i32
  }
}

</mosaic_0001>

<llo_original>
// kernel: tpu_custom_call.1
$region0: #{tpu_custom_call.1}
  #allocation0 [shape = 'u32[]', space=smem, size = 0x4, offset = 0x4, fixed_abs, tag = 'smem constant byte address 0x4 - core index']
  #allocation1 [shape = 'u32[144,128]{1,0:T(1,128)}', space=vmem, size = 0x12000, scoped, tag = 'internal scratch']
  %s0 = inlined_call_operand.vmem [shape: f32[128,64], index: 0, kind: input, shape index: {}]
  %s1 = inlined_call_operand.vmem [shape: f32[128,64], index: 1, kind: input, shape index: {}]
  %s2 = inlined_call_operand.vmem [shape: bf16[64,128], index: 2, kind: input, shape index: {}]
  %s3 = inlined_call_operand.vmem [shape: bf16[64,128], index: 3, kind: input, shape index: {}]
  %s4 = inlined_call_operand.vmem [shape: f32[1,128], index: 4, kind: input, shape index: {}]
  %s5 = inlined_call_operand.hbm [shape: f32[128,128], index: 5, kind: output, shape index: {}]
  %s6 = sld [smem:[#allocation0]]
  $region30: #{tpu_custom_call.1} parent=0
    _
  %s8 = ssub.s32 1, %s6
  %s9 = scalar_select 0, %s8, %s6
  $region1: #{tpu_custom_call.1} parent=0
    #allocation2 [shape = 'u8[65536]{0}', space=vmem, size = 0x10000, scoped, tag = 'output window, operand 0, single buffered']
    #allocation3 [shape = 's32[1]{0}', space=sflag, size = 0x4, scoped, tag = 'scoped memory for tpu_custom_call.1']
    %10 = vsyncpa [#allocation3], 0
    // Predicated region
    $region2: #{tpu_custom_call.1} parent=1 // pred_check
      _
    $region3: #{tpu_custom_call.1} parent=1 // pred_check_branch
      %12 = sbr.rel (0) target = $region5
    $region4: #{tpu_custom_call.1} parent=1 // pred_region
      _
    $region5: #{tpu_custom_call.1} parent=1 // pred_fallthru
      _
    // Predicated region
    $region6: #{tpu_custom_call.1} parent=1 // pred_check
      _
    $region7: #{tpu_custom_call.1} parent=1 // pred_check_branch
      %14 = sbr.rel (0) target = $region9
    $region8: #{tpu_custom_call.1} parent=1 // pred_region
      _
    $region9: #{tpu_custom_call.1} parent=1 // pred_fallthru
      _
    // Predicated region
    $region10: #{tpu_custom_call.1} parent=1 // pred_check
      _
    $region11: #{tpu_custom_call.1} parent=1 // pred_check_branch
      %16 = sbr.rel (0) target = $region13
    $region12: #{tpu_custom_call.1} parent=1 // pred_region
      _
    $region13: #{tpu_custom_call.1} parent=1 // pred_fallthru
      _
    // Predicated region
    $region14: #{tpu_custom_call.1} parent=1 // pred_check
      _
    $region15: #{tpu_custom_call.1} parent=1 // pred_check_branch
      %18 = sbr.rel (0) target = $region17
    $region16: #{tpu_custom_call.1} parent=1 // pred_region
      _
    $region17: #{tpu_custom_call.1} parent=1 // pred_fallthru
      _
    // Predicated region
    $region18: #{tpu_custom_call.1} parent=1 // pred_check
      _
    $region19: #{tpu_custom_call.1} parent=1 // pred_check_branch
      %20 = sbr.rel (0) target = $region21
    $region20: #{tpu_custom_call.1} parent=1 // pred_region
      _
    $region21: #{tpu_custom_call.1} parent=1 // pred_fallthru
      _
    %v22 = vld [vmem:[%s0] sm:$0xff]
    %v23 = vld [vmem:[%s0 + $0x8] sm:$0xff]
    %v24 = vld [vmem:[%s0 + $0x10] sm:$0xff]
    %v25 = vld [vmem:[%s0 + $0x18] sm:$0xff]
    %v26 = vld [vmem:[%s0 + $0x20] sm:$0xff]
    %v27 = vld [vmem:[%s0 + $0x28] sm:$0xff]
    %v28 = vld [vmem:[%s0 + $0x30] sm:$0xff]
    %v29 = vld [vmem:[%s0 + $0x38] sm:$0xff]
    %v30 = vld [vmem:[%s0 + $0x40] sm:$0xff]
    %v31 = vld [vmem:[%s0 + $0x48] sm:$0xff]
    %v32 = vld [vmem:[%s0 + $0x50] sm:$0xff]
    %v33 = vld [vmem:[%s0 + $0x58] sm:$0xff]
    %v34 = vld [vmem:[%s0 + $0x60] sm:$0xff]
    %v35 = vld [vmem:[%s0 + $0x68] sm:$0xff]
    %v36 = vld [vmem:[%s0 + $0x70] sm:$0xff]
    %v37 = vld [vmem:[%s0 + $0x78] sm:$0xff]
    %v38 = vld [vmem:[%s1] sm:$0xff]
    %v39 = vld [vmem:[%s1 + $0x8] sm:$0xff]
    %v40 = vld [vmem:[%s1 + $0x10] sm:$0xff]
    %v41 = vld [vmem:[%s1 + $0x18] sm:$0xff]
    %v42 = vld [vmem:[%s1 + $0x20] sm:$0xff]
    %v43 = vld [vmem:[%s1 + $0x28] sm:$0xff]
    %v44 = vld [vmem:[%s1 + $0x30] sm:$0xff]
    %v45 = vld [vmem:[%s1 + $0x38] sm:$0xff]
    %v46 = vld [vmem:[%s1 + $0x40] sm:$0xff]
    %v47 = vld [vmem:[%s1 + $0x48] sm:$0xff]
    %v48 = vld [vmem:[%s1 + $0x50] sm:$0xff]
    %v49 = vld [vmem:[%s1 + $0x58] sm:$0xff]
    %v50 = vld [vmem:[%s1 + $0x60] sm:$0xff]
    %v51 = vld [vmem:[%s1 + $0x68] sm:$0xff]
    %v52 = vld [vmem:[%s1 + $0x70] sm:$0xff]
    %v53 = vld [vmem:[%s1 + $0x78] sm:$0xff]
    %v54 = vpack.c.bf16 %v23, %v22
    %v55 = vpack.c.bf16 %v25, %v24
    %v56 = vpack.c.bf16 %v27, %v26
    %v57 = vpack.c.bf16 %v29, %v28
    %v58 = vpack.c.bf16 %v31, %v30
    %v59 = vpack.c.bf16 %v33, %v32
    %v60 = vpack.c.bf16 %v35, %v34
    %v61 = vpack.c.bf16 %v37, %v36
    %v62 = vpack.c.bf16 %v39, %v38
    %v63 = vpack.c.bf16 %v41, %v40
    %v64 = vpack.c.bf16 %v43, %v42
    %v65 = vpack.c.bf16 %v45, %v44
    %v66 = vpack.c.bf16 %v47, %v46
    %v67 = vpack.c.bf16 %v49, %v48
    %v68 = vpack.c.bf16 %v51, %v50
    %v69 = vpack.c.bf16 %v53, %v52
    %v70 = vld [vmem:[%s2] sm:$0xf]
    %v71 = vld [vmem:[%s2 + $0x4] sm:$0xf]
    %v72 = vld [vmem:[%s2 + $0x8] sm:$0xf]
    %v73 = vld [vmem:[%s2 + $0xc] sm:$0xf]
    %v74 = vld [vmem:[%s2 + $0x10] sm:$0xf]
    %v75 = vld [vmem:[%s2 + $0x14] sm:$0xf]
    %v76 = vld [vmem:[%s2 + $0x18] sm:$0xf]
    %v77 = vld [vmem:[%s2 + $0x1c] sm:$0xf]
    %v78 = vld [vmem:[%s3] sm:$0xf]
    %v79 = vld [vmem:[%s3 + $0x4] sm:$0xf]
    %v80 = vld [vmem:[%s3 + $0x8] sm:$0xf]
    %v81 = vld [vmem:[%s3 + $0xc] sm:$0xf]
    %v82 = vld [vmem:[%s3 + $0x10] sm:$0xf]
    %v83 = vld [vmem:[%s3 + $0x14] sm:$0xf]
    %v84 = vld [vmem:[%s3 + $0x18] sm:$0xf]
    %v85 = vld [vmem:[%s3 + $0x1c] sm:$0xf]
    %v94 = vunpack.c.l.b16 %v78
    %v95 = vunpack.c.l.b16 %v79
    %v96 = vunpack.c.l.b16 %v80
    %v97 = vunpack.c.l.b16 %v81
    %v98 = vunpack.c.l.b16 %v82
    %v99 = vunpack.c.l.b16 %v83
    %v100 = vunpack.c.l.b16 %v84
    %v101 = vunpack.c.l.b16 %v85
    %v102 = vpack.c.b16 %v95, %v94
    %v103 = vpack.c.b16 %v97, %v96
    %v104 = vpack.c.b16 %v99, %v98
    %v105 = vpack.c.b16 %v101, %v100
    %vm110 = vcmask 523264
    %v112 = vsel %vm110, %v62, 0
    %v115 = vsel %vm110, %v63, 0
    %v118 = vsel %vm110, %v64, 0
    %v121 = vsel %vm110, %v65, 0
    %v124 = vsel %vm110, %v66, 0
    %v127 = vsel %vm110, %v67, 0
    %v130 = vsel %vm110, %v68, 0
    %v133 = vsel %vm110, %v69, 0
    %135 = vmatprep.subr.bf16.mxu0 0
    %136 = vmatpush1.bf16.msra.mxu0 0
    %137 = vmatprep.subr.bf16.mxu0 0
    %138 = vmatpush1.bf16.msra.mxu0 0
    %139 = vmatprep.subr.bf16.mxu0 0
    %140 = vmatpush1.bf16.msra.mxu0 0
    %141 = vmatprep.subr.bf16.mxu0 0
    %142 = vmatpush1.bf16.msra.mxu0 0
    %143 = vmatprep.subr.bf16.mxu0 0
    %144 = vmatpush1.bf16.msra.mxu0 %v105
    %145 = vmatprep.subr.bf16.mxu0 0
    %146 = vmatpush1.bf16.msra.mxu0 %v104
    %147 = vmatprep.subr.bf16.mxu0 0
    %148 = vmatpush1.bf16.msra.mxu0 %v103
    %149 = vmatprep.subr.bf16.mxu0 0
    %150 = vmatpush1.bf16.msra.mxu0 %v102
    %151 = vmatprep.subr.bf16.mxu0 0
    %152 = vmatpush2.bf16.msra.mxu0 0
    %153 = vmatprep.subr.bf16.mxu0 0
    %154 = vmatpush2.bf16.msra.mxu0 0
    %155 = vmatprep.subr.bf16.mxu0 0
    %156 = vmatpush2.bf16.msra.mxu0 0
    %157 = vmatprep.subr.bf16.mxu0 0
    %158 = vmatpush2.bf16.msra.mxu0 0
    %159 = vmatprep.subr.bf16.mxu0 0
    %160 = vmatpush2.bf16.msra.mxu0 0
    %161 = vmatprep.subr.bf16.mxu0 0
    %162 = vmatpush2.bf16.msra.mxu0 0
    %163 = vmatprep.subr.bf16.mxu0 0
    %164 = vmatpush2.bf16.msra.mxu0 0
    %165 = vmatprep.subr.bf16.mxu0 0
    %166 = vmatpush2.bf16.msra.mxu0 0
    %167 = vmatprep.mubr.bf16.mxu0 0
    %168 = vmatmul.mubr.bf16.gmra.mxu0 %v112
    %v169 = vpop.f32.mrf.mxu0
    %v170 = vadd.f32 0.0, %v169
    %v171 = vpop.f32.mrf.mxu0
    %v172 = vpop.f32.mrf.mxu0
    %v173 = vadd.f32 0.0, %v172
    %v174 = vpop.f32.mrf.mxu0
    %175 = vmatprep.mubr.bf16.mxu0 0
    %176 = vmatmul.mubr.bf16.gmra.mxu0 %v115
    %v177 = vpop.f32.mrf.mxu0
    %v178 = vadd.f32 0.0, %v177
    %v179 = vpop.f32.mrf.mxu0
    %v180 = vpop.f32.mrf.mxu0
    %v181 = vadd.f32 0.0, %v180
    %v182 = vpop.f32.mrf.mxu0
    %183 = vmatprep.mubr.bf16.mxu0 0
    %184 = vmatmul.mubr.bf16.gmra.mxu0 %v118
    %v185 = vpop.f32.mrf.mxu0
    %v186 = vadd.f32 0.0, %v185
    %v187 = vpop.f32.mrf.mxu0
    %v188 = vpop.f32.mrf.mxu0
    %v189 = vadd.f32 0.0, %v188
    %v190 = vpop.f32.mrf.mxu0
    %191 = vmatprep.mubr.bf16.mxu0 0
    %192 = vmatmul.mubr.bf16.gmra.mxu0 %v121
    %v193 = vpop.f32.mrf.mxu0
    %v194 = vadd.f32 0.0, %v193
    %v195 = vpop.f32.mrf.mxu0
    %v196 = vpop.f32.mrf.mxu0
    %v197 = vadd.f32 0.0, %v196
    %v198 = vpop.f32.mrf.mxu0
    %199 = vmatprep.mubr.bf16.mxu0 0
    %200 = vmatmul.mubr.bf16.gmra.mxu0 %v124
    %v201 = vpop.f32.mrf.mxu0
    %v202 = vadd.f32 0.0, %v201
    %v203 = vpop.f32.mrf.mxu0
    %v204 = vpop.f32.mrf.mxu0
    %v205 = vadd.f32 0.0, %v204
    %v206 = vpop.f32.mrf.mxu0
    %207 = vmatprep.mubr.bf16.mxu0 0
    %208 = vmatmul.mubr.bf16.gmra.mxu0 %v127
    %v209 = vpop.f32.mrf.mxu0
    %v210 = vadd.f32 0.0, %v209
    %v211 = vpop.f32.mrf.mxu0
    %v212 = vpop.f32.mrf.mxu0
    %v213 = vadd.f32 0.0, %v212
    %v214 = vpop.f32.mrf.mxu0
    %215 = vmatprep.mubr.bf16.mxu0 0
    %216 = vmatmul.mubr.bf16.gmra.mxu0 %v130
    %v217 = vpop.f32.mrf.mxu0
    %v218 = vadd.f32 0.0, %v217
    %v219 = vpop.f32.mrf.mxu0
    %v220 = vpop.f32.mrf.mxu0
    %v221 = vadd.f32 0.0, %v220
    %v222 = vpop.f32.mrf.mxu0
    %223 = vmatprep.mubr.bf16.mxu0 0
    %224 = vmatmul.mubr.bf16.gmra.mxu0 %v133
    %v225 = vpop.f32.mrf.mxu0
    %v226 = vadd.f32 0.0, %v225
    %v227 = vpop.f32.mrf.mxu0
    %v228 = vpop.f32.mrf.mxu0
    %v229 = vadd.f32 0.0, %v228
    %v230 = vpop.f32.mrf.mxu0
    %231 = vdwg.mxu0
    %v240 = vunpack.c.l.b16 %v70
    %v241 = vunpack.c.l.b16 %v71
    %v242 = vunpack.c.l.b16 %v72
    %v243 = vunpack.c.l.b16 %v73
    %v244 = vunpack.c.l.b16 %v74
    %v245 = vunpack.c.l.b16 %v75
    %v246 = vunpack.c.l.b16 %v76
    %v247 = vunpack.c.l.b16 %v77
    %v248 = vpack.c.b16 %v241, %v240
    %v249 = vpack.c.b16 %v243, %v242
    %v250 = vpack.c.b16 %v245, %v244
    %v251 = vpack.c.b16 %v247, %v246
    %v257 = vsel %vm110, %v54, 0
    %v260 = vsel %vm110, %v55, 0
    %v263 = vsel %vm110, %v56, 0
    %v266 = vsel %vm110, %v57, 0
    %v269 = vsel %vm110, %v58, 0
    %v272 = vsel %vm110, %v59, 0
    %v275 = vsel %vm110, %v60, 0
    %v278 = vsel %vm110, %v61, 0
    %280 = vmatprep.subr.bf16.mxu0 0
    %281 = vmatpush1.bf16.msra.mxu0 0
    %282 = vmatprep.subr.bf16.mxu0 0
    %283 = vmatpush1.bf16.msra.mxu0 0
    %284 = vmatprep.subr.bf16.mxu0 0
    %285 = vmatpush1.bf16.msra.mxu0 0
    %286 = vmatprep.subr.bf16.mxu0 0
    %287 = vmatpush1.bf16.msra.mxu0 0
    %288 = vmatprep.subr.bf16.mxu0 0
    %289 = vmatpush1.bf16.msra.mxu0 %v251
    %290 = vmatprep.subr.bf16.mxu0 0
    %291 = vmatpush1.bf16.msra.mxu0 %v250
    %292 = vmatprep.subr.bf16.mxu0 0
    %293 = vmatpush1.bf16.msra.mxu0 %v249
    %294 = vmatprep.subr.bf16.mxu0 0
    %295 = vmatpush1.bf16.msra.mxu0 %v248
    %296 = vmatprep.subr.bf16.mxu0 0
    %297 = vmatpush2.bf16.msra.mxu0 0
    %298 = vmatprep.subr.bf16.mxu0 0
    %299 = vmatpush2.bf16.msra.mxu0 0
    %300 = vmatprep.subr.bf16.mxu0 0
    %301 = vmatpush2.bf16.msra.mxu0 0
    %302 = vmatprep.subr.bf16.mxu0 0
    %303 = vmatpush2.bf16.msra.mxu0 0
    %304 = vmatprep.subr.bf16.mxu0 0
    %305 = vmatpush2.bf16.msra.mxu0 0
    %306 = vmatprep.subr.bf16.mxu0 0
    %307 = vmatpush2.bf16.msra.mxu0 0
    %308 = vmatprep.subr.bf16.mxu0 0
    %309 = vmatpush2.bf16.msra.mxu0 0
    %310 = vmatprep.subr.bf16.mxu0 0
    %311 = vmatpush2.bf16.msra.mxu0 0
    %312 = vmatprep.mubr.bf16.mxu0 0
    %313 = vmatmul.mubr.bf16.gmra.mxu0 %v257
    %v314 = vpop.f32.mrf.mxu0
    %v315 = vadd.f32 %v170, %v314
    %v316 = vpop.f32.mrf.mxu0
    %v317 = vpop.f32.mrf.mxu0
    %v318 = vadd.f32 %v173, %v317
    %v319 = vpop.f32.mrf.mxu0
    %320 = vmatprep.mubr.bf16.mxu0 0
    %321 = vmatmul.mubr.bf16.gmra.mxu0 %v260
    %v322 = vpop.f32.mrf.mxu0
    %v323 = vadd.f32 %v178, %v322
    %v324 = vpop.f32.mrf.mxu0
    %v325 = vpop.f32.mrf.mxu0
    %v326 = vadd.f32 %v181, %v325
    %v327 = vpop.f32.mrf.mxu0
    %328 = vmatprep.mubr.bf16.mxu0 0
    %329 = vmatmul.mubr.bf16.gmra.mxu0 %v263
    %v330 = vpop.f32.mrf.mxu0
    %v331 = vadd.f32 %v186, %v330
    %v332 = vpop.f32.mrf.mxu0
    %v333 = vpop.f32.mrf.mxu0
    %v334 = vadd.f32 %v189, %v333
    %v335 = vpop.f32.mrf.mxu0
    %336 = vmatprep.mubr.bf16.mxu0 0
    %337 = vmatmul.mubr.bf16.gmra.mxu0 %v266
    %v338 = vpop.f32.mrf.mxu0
    %v339 = vadd.f32 %v194, %v338
    %v340 = vpop.f32.mrf.mxu0
    %v341 = vpop.f32.mrf.mxu0
    %v342 = vadd.f32 %v197, %v341
    %v343 = vpop.f32.mrf.mxu0
    %344 = vmatprep.mubr.bf16.mxu0 0
    %345 = vmatmul.mubr.bf16.gmra.mxu0 %v269
    %v346 = vpop.f32.mrf.mxu0
    %v347 = vadd.f32 %v202, %v346
    %v348 = vpop.f32.mrf.mxu0
    %v349 = vpop.f32.mrf.mxu0
    %v350 = vadd.f32 %v205, %v349
    %v351 = vpop.f32.mrf.mxu0
    %352 = vmatprep.mubr.bf16.mxu0 0
    %353 = vmatmul.mubr.bf16.gmra.mxu0 %v272
    %v354 = vpop.f32.mrf.mxu0
    %v355 = vadd.f32 %v210, %v354
    %v356 = vpop.f32.mrf.mxu0
    %v357 = vpop.f32.mrf.mxu0
    %v358 = vadd.f32 %v213, %v357
    %v359 = vpop.f32.mrf.mxu0
    %360 = vmatprep.mubr.bf16.mxu0 0
    %361 = vmatmul.mubr.bf16.gmra.mxu0 %v275
    %v362 = vpop.f32.mrf.mxu0
    %v363 = vadd.f32 %v218, %v362
    %v364 = vpop.f32.mrf.mxu0
    %v365 = vpop.f32.mrf.mxu0
    %v366 = vadd.f32 %v221, %v365
    %v367 = vpop.f32.mrf.mxu0
    %368 = vmatprep.mubr.bf16.mxu0 0
    %369 = vmatmul.mubr.bf16.gmra.mxu0 %v278
    %v370 = vpop.f32.mrf.mxu0
    %v371 = vadd.f32 %v226, %v370
    %v372 = vpop.f32.mrf.mxu0
    %v373 = vpop.f32.mrf.mxu0
    %v374 = vadd.f32 %v229, %v373
    %v375 = vpop.f32.mrf.mxu0
    %376 = vdwg.mxu0
    %v377 = vld [vmem:[%s4] sm:$0x1]
    %v379 = vlaneseq
    %v380 = vshrl.u32 %v379, 7
    %v381 = vsub.s32 0, %v380
    %v382 = vrot.slane %v377, %v381
    %v384 = vadd.f32 %v315, %v382
    %v385 = vadd.f32 %v318, %v382
    %v386 = vadd.f32 %v323, %v382
    %v387 = vadd.f32 %v326, %v382
    %v388 = vadd.f32 %v331, %v382
    %v389 = vadd.f32 %v334, %v382
    %v390 = vadd.f32 %v339, %v382
    %v391 = vadd.f32 %v342, %v382
    %v392 = vadd.f32 %v347, %v382
    %v393 = vadd.f32 %v350, %v382
    %v394 = vadd.f32 %v355, %v382
    %v395 = vadd.f32 %v358, %v382
    %v396 = vadd.f32 %v363, %v382
    %v397 = vadd.f32 %v366, %v382
    %v398 = vadd.f32 %v371, %v382
    %v399 = vadd.f32 %v374, %v382
    %v400 = vmax.f32 %v384, 0.0
    %v401 = vmax.f32 %v385, 0.0
    %v402 = vmax.f32 %v386, 0.0
    %v403 = vmax.f32 %v387, 0.0
    %v404 = vmax.f32 %v388, 0.0
    %v405 = vmax.f32 %v389, 0.0
    %v406 = vmax.f32 %v390, 0.0
    %v407 = vmax.f32 %v391, 0.0
    %v408 = vmax.f32 %v392, 0.0
    %v409 = vmax.f32 %v393, 0.0
    %v410 = vmax.f32 %v394, 0.0
    %v411 = vmax.f32 %v395, 0.0
    %v412 = vmax.f32 %v396, 0.0
    %v413 = vmax.f32 %v397, 0.0
    %v414 = vmax.f32 %v398, 0.0
    %v415 = vmax.f32 %v399, 0.0
    %416 = vst [vmem:[#allocation2] sm:$0xff] %v400
    %417 = vst [vmem:[#allocation2 + $0x8] sm:$0xff] %v401
    %418 = vst [vmem:[#allocation2 + $0x10] sm:$0xff] %v402
    %419 = vst [vmem:[#allocation2 + $0x18] sm:$0xff] %v403
    %420 = vst [vmem:[#allocation2 + $0x20] sm:$0xff] %v404
    %421 = vst [vmem:[#allocation2 + $0x28] sm:$0xff] %v405
    %422 = vst [vmem:[#allocation2 + $0x30] sm:$0xff] %v406
    %423 = vst [vmem:[#allocation2 + $0x38] sm:$0xff] %v407
    %424 = vst [vmem:[#allocation2 + $0x40] sm:$0xff] %v408
    %425 = vst [vmem:[#allocation2 + $0x48] sm:$0xff] %v409
    %426 = vst [vmem:[#allocation2 + $0x50] sm:$0xff] %v410
    %427 = vst [vmem:[#allocation2 + $0x58] sm:$0xff] %v411
    %428 = vst [vmem:[#allocation2 + $0x60] sm:$0xff] %v412
    %429 = vst [vmem:[#allocation2 + $0x68] sm:$0xff] %v413
    %430 = vst [vmem:[#allocation2 + $0x70] sm:$0xff] %v414
    %431 = vst [vmem:[#allocation2 + $0x78] sm:$0xff] %v415
    // Predicated region
    $region22: #{tpu_custom_call.1} parent=1 // pred_check
      _
    $region23: #{tpu_custom_call.1} parent=1 // pred_check_branch
      %433 = sbr.rel (0) target = $region25
    $region24: #{tpu_custom_call.1} parent=1 // pred_region
      %s435 = ssub.s32 2048, 2048
      %436 = vsyncadd [#allocation3], %s435
      %s437 = sshll.u32 [#allocation2], 4
      %s438 = int_to_ptr.vmem [resolvable:$true] %s437
      %443 = dma.vmem_to_hbm [thread:$0]  %s438, 2048, %s5, [#allocation3], 128, 128, 8
    $region25: #{tpu_custom_call.1} parent=1 // pred_fallthru
      _
    // Predicated region
    $region26: #{tpu_custom_call.1} parent=1 // pred_check
      _
    $region27: #{tpu_custom_call.1} parent=1 // pred_check_branch
      %445 = sbr.rel (0) target = $region29
    $region28: #{tpu_custom_call.1} parent=1 // pred_region
      %446 = dma.done [#allocation3], 2048
    $region29: #{tpu_custom_call.1} parent=1 // pred_fallthru
      _
    %447 = vsyncpa [#allocation3], 1

</llo_original>
